<compile_context>
chip_gen: v5e
topology: v5e:2x2
jax: 0.10.0
libtpu: 0.0.40
codegen_flags: <defaults>
</compile_context>

<pallas_src>
import jax
import jax.numpy as jnp
from jax import lax
from jax.experimental import pallas as pl
from jax.experimental.pallas import tpu as pltpu


def _round_up(x, m):
    return ((x + m - 1) // m) * m


def _round_down(x, m):
    return (x // m) * m


def _sublane_quantum(dtype):
    # f32 -> 8, bf16 -> 16, int8/fp8 -> 32 rows (sublane packing quantum).
    return max(8, 32 // jnp.dtype(dtype).itemsize)


def _vmem_caps():
    """Per-generation (tiling budget, vmem_limit_bytes)."""
    try:
        cap = int(getattr(pltpu.get_tpu_info(), "vmem_capacity_bytes", 0))
    except Exception:
        cap = 0
    if cap <= 0:
        cap = 64 << 20  # conservative default = v7x per-TensorCore VMEM
    budget = (cap * 3) // 4                       # ~96 MiB v5e/v6e, ~48 MiB v7x
    limit = min(cap - (2 << 20), (cap * 9) // 10)
    return budget, limit


def _invariant_spec(shape, index_map, single_buffer):
    """BlockSpec for a grid-invariant operand; single-buffer it when supported
    so the resident weight costs 1x (not 2x) VMEM."""
    if single_buffer and hasattr(pl, "Buffered"):
        try:
            return pl.BlockSpec(shape, index_map, pipeline_mode=pl.Buffered(1))
        except TypeError:  # older jax without pipeline_mode
            pass
    return pl.BlockSpec(shape, index_map)


def _epilogue(y, b_ref, o_ref, *, use_bias, normalize, scale):
    if use_bias:
        y = y + b_ref[...].astype(jnp.float32)
    if normalize:
        # Per-row L2 normalization; rsqrt runs on the EUP and `scale` is folded
        # into the same (TB, 1) factor -> one broadcast multiply.
        sumsq = jnp.sum(y * y, axis=-1, keepdims=True)
        y = y * (lax.rsqrt(sumsq) * scale)
    elif scale != 1.0:  # only reached when scale was not folded into W / b
        y = y * scale
    o_ref[...] = y.astype(o_ref.dtype)


def _make_resident_kernel(use_bias, normalize, scale):
    # Whole reduction dim resident in VMEM: one MXU matmul per batch tile.
    def kernel(*refs):
        if use_bias:
            x_ref, w_ref, b_ref, o_ref = refs
        else:
            x_ref, w_ref, o_ref = refs
            b_ref = None
        y = jnp.dot(x_ref[...], w_ref[...], preferred_element_type=jnp.float32)
        _epilogue(y, b_ref, o_ref, use_bias=use_bias, normalize=normalize,
                  scale=scale)
    return kernel


def _make_ktiled_kernel(use_bias, normalize, scale):
    # Reduction (obs_dim) tiled across grid axis 1 with an f32 accumulator.
    def kernel(*refs):
        if use_bias:
            x_ref, w_ref, b_ref, o_ref, acc_ref = refs
        else:
            x_ref, w_ref, o_ref, acc_ref = refs
            b_ref = None
        k = pl.program_id(1)

        @pl.when(k == 0)
        def _():
            acc_ref[...] = jnp.zeros_like(acc_ref)

        acc_ref[...] += jnp.dot(x_ref[...], w_ref[...],
                                preferred_element_type=jnp.float32)

        @pl.when(k == pl.num_programs(1) - 1)
        def _():
            _epilogue(acc_ref[...], b_ref, o_ref, use_bias=use_bias,
                      normalize=normalize, scale=scale)
    return kernel


class LinearModelPallas:
    """Pallas TPU equivalent of the PyTorch `LinearModel` forward pass."""

    def __init__(self, weight, bias=None, *, scale=1.0, normalize=False,
                 compute_dtype=None, _force_k_tiling=False):
        # `weight` uses the torch nn.Linear layout: (act_dim, obs_dim).
        weight = jnp.asarray(weight)
        act_dim, obs_dim = weight.shape
        self.obs_dim, self.act_dim = int(obs_dim), int(act_dim)
        self.scale = float(scale)
        self.normalize = bool(normalize)
        self.use_bias = bias is not None
        self._force_k = bool(_force_k_tiling)

        w_t = weight.T                                     # (obs_dim, act_dim)
        if compute_dtype is not None:
            # Optional: cache weights in bf16; callers should then also stream
            # bf16 obs to halve HBM traffic on the dominant input stream.
            w_t = w_t.astype(compute_dtype)
        if not self.normalize and self.scale != 1.0:
            # Fold `scale` into the cached params -> no per-tile multiply.
            w_t = w_t * jnp.asarray(self.scale, w_t.dtype)

        # Lane-dense output: pad act_dim to a multiple of 128 with zero columns
        # (row norms unchanged). Done ONCE here, never per call.
        self.act_dim_p = _round_up(self.act_dim, 128)
        if self.act_dim_p != self.act_dim:
            w_t = jnp.pad(w_t, ((0, 0), (0, self.act_dim_p - self.act_dim)))
        self.w_t = w_t

        if self.use_bias:
            b = jnp.asarray(bias).reshape(1, self.act_dim).astype(jnp.float32)
            if not self.normalize and self.scale != 1.0:
                b = b * self.scale
            if self.act_dim_p != self.act_dim:
                b = jnp.pad(b, ((0, 0), (0, self.act_dim_p - self.act_dim)))
            self.bias = b
        else:
            self.bias = None

        # `scale` stays an epilogue factor only on the normalize path.
        self._kernel_scale = self.scale if self.normalize else 1.0
        self._vmem_budget, self._vmem_limit = _vmem_caps()
        self._single_buffer_ok = True

    # --- public API ---------------------------------------------------------
    def __call__(self, obs):
        return self.forward(obs)

    def get_action(self, obs):
        return self.forward(obs)

    def forward(self, obs):
        obs = jnp.asarray(obs)
        squeeze = obs.ndim == 1
        if squeeze:
            obs = obs[None, :]
        if obs.shape[-1] != self.obs_dim:
            raise ValueError(f"expected obs[..., {self.obs_dim}], got {obs.shape}")
        out = self._forward(obs)
        if self.act_dim_p != self.act_dim:
            out = out[:, :self.act_dim]
        return out[0] if squeeze else out

    # --- internals ----------------------------------------------------------
    def _forward(self, obs):
        if self._single_buffer_ok:
            try:
                return self._run(obs, single_buffer=True)
            except Exception:
                # e.g. pipeline_mode=Buffered(1) rejected by this jax/Mosaic
                # version; fall back to default double-buffered invariants.
                self._single_buffer_ok = False
        return self._run(obs, single_buffer=False)

    def _run(self, obs, *, single_buffer):
        B, obs_dim = obs.shape
        act_dim_p = self.act_dim_p
        x_it = obs.dtype.itemsize
        w_it = self.w_t.dtype.itemsize
        o_it = x_it
        q = _sublane_quantum(obs.dtype)
        budget = self._vmem_budget
        w_factor = 1 if single_buffer else 2
        w_bytes = obs_dim * act_dim_p * w_it

        # ---- resident weight vs. K (reduction) tiling -----------------------
        use_k_tiling, tk = False, obs_dim
        want_k = self._force_k or (w_factor * w_bytes > (budget * 3) // 5)
        if want_k and obs_dim % 128 == 0 and obs_dim > 128:
            n128 = obs_dim // 128
            # Double-buffered weight K-blocks should take <= ~1/3 of the budget.
            cap_units = max(1, budget // (6 * 128 * act_dim_p * w_it))
            if self._force_k:
                cap_units = min(cap_units, max(1, n128 // 2))
            d = 1
            for cand in range(min(n128, cap_units), 0, -1):
                if n128 % cand == 0:
                    d = cand
                    break
            tk = 128 * d
            use_k_tiling = tk < obs_dim
        # (If obs_dim is not 128-aligned, keep the resident path best-effort.)

        # ---- batch tile from the VMEM budget (no arbitrary row cap) ---------
        if use_k_tiling:
            resident = 2 * tk * act_dim_p * w_it              # streamed W blocks
            per_row = 2 * tk * x_it + 2 * act_dim_p * o_it + act_dim_p * 4
        else:
            resident = w_factor * w_bytes                     # resident weight
            per_row = 2 * obs_dim * x_it + 2 * act_dim_p * o_it + act_dim_p * 4
        if self.use_bias:
            resident += (1 if single_buffer else 2) * act_dim_p * 4
        avail = budget - resident - (1 << 20)                 # compiler slack
        tb = _round_down(max(avail, 0) // per_row, q)
        if B <= q:
            tb = B                                            # single exact tile
        else:
            tb = max(q, min(tb, _round_down(B, q)))           # ragged last tile
        nb = pl.cdiv(B, tb)

        use_bias = self.use_bias
        if use_k_tiling:
            kernel = _make_ktiled_kernel(use_bias, self.normalize,
                                         self._kernel_scale)
            grid = (nb, obs_dim // tk)
            in_specs = [
                pl.BlockSpec((tb, tk), lambda i, k: (i, k)),
                pl.BlockSpec((tk, act_dim_p), lambda i, k: (k, 0)),
            ]
            if use_bias:
                in_specs.append(_invariant_spec((1, act_dim_p),
                                                lambda i, k: (0, 0),
                                                single_buffer))
            out_specs = pl.BlockSpec((tb, act_dim_p), lambda i, k: (i, 0))
            scratch = [pltpu.VMEM((tb, act_dim_p), jnp.float32)]
            dims = ("parallel", "arbitrary")
        else:
            kernel = _make_resident_kernel(use_bias, self.normalize,
                                           self._kernel_scale)
            grid = (nb,)
            in_specs = [
                pl.BlockSpec((tb, obs_dim), lambda i: (i, 0)),
                _invariant_spec((obs_dim, act_dim_p), lambda i: (0, 0),
                                single_buffer),
            ]
            if use_bias:
                in_specs.append(_invariant_spec((1, act_dim_p),
                                                lambda i: (0, 0), single_buffer))
            out_specs = pl.BlockSpec((tb, act_dim_p), lambda i: (i, 0))
            scratch = []
            # TODO(synk): on v7x confirm "parallel" shards the batch axis across
            # both TensorCores; otherwise switch to pltpu.CORE_PARALLEL.
            dims = ("parallel",)

        args = [obs, self.w_t] + ([self.bias] if use_bias else [])
        return pl.pallas_call(
            kernel,
            out_shape=jax.ShapeDtypeStruct((B, act_dim_p), obs.dtype),
            grid_spec=pltpu.PrefetchScalarGridSpec(
                num_scalar_prefetch=0,
                grid=grid,
                in_specs=in_specs,
                out_specs=out_specs,
                scratch_shapes=scratch,
            ),
            compiler_params=pltpu.CompilerParams(
                dimension_semantics=dims,
                vmem_limit_bytes=self._vmem_limit,
            ),
        )(*args)


if __name__ == "__main__":
    key = jax.random.PRNGKey(0)
    k_obs, k_w, k_b, k_obs2, k_w2 = jax.random.split(key, 5)

    # ---- Config 1: normalize=True, scale=2.0, no bias (typical usage) ------
    B, obs_dim, act_dim = 8, 32, 16
    obs = jax.random.normal(k_obs, (B, obs_dim), dtype=jnp.float32)
    weight = jax.random.normal(k_w, (act_dim, obs_dim), dtype=jnp.float32) * 0.1
    model1 = LinearModelPallas(weight, scale=2.0, normalize=True)
    out1 = jax.block_until_ready(model1(obs))
    lin = obs @ weight.T
    ref1 = lin / jnp.linalg.norm(lin, axis=1, keepdims=True) * 2.0
    assert out1.shape == (B, act_dim)
    assert jnp.allclose(out1, ref1, atol=1e-3, rtol=1e-3), "mismatch (normalize)"

    # ---- Config 2: bias + scale (folded into cached params), no normalize --
    bias = jax.random.normal(k_b, (act_dim,), dtype=jnp.float32) * 0.1
    model2 = LinearModelPallas(weight, bias, scale=1.5, normalize=False)
    out2 = jax.block_until_ready(model2(obs))
    ref2 = (obs @ weight.T + bias[None, :]) * 1.5
    assert out2.shape == (B, act_dim)
    assert jnp.allclose(out2, ref2, atol=1e-3, rtol=1e-3), "mismatch (bias)"

    # ---- Config 3: 1-D obs (single observation), vector norm ---------------
    out3 = jax.block_until_ready(model1.get_action(obs[0]))
    assert out3.shape == (act_dim,)
    assert jnp.allclose(out3, ref1[0], atol=1e-3, rtol=1e-3), "mismatch (1-D obs)"

    # ---- Config 4: forced K-tiling fallback (large-weight code path) -------
    B2, obs_dim2, act_dim2 = 16, 256, 128
    obs_b = jax.random.normal(k_obs2, (B2, obs_dim2), dtype=jnp.float32)
    w_b = jax.random.normal(k_w2, (act_dim2, obs_dim2), dtype=jnp.float32) * 0.05
    model4 = LinearModelPallas(w_b, scale=0.5, normalize=True,
                               _force_k_tiling=True)
    out4 = jax.block_until_ready(model4(obs_b))
    lin4 = obs_b @ w_b.T
    ref4 = lin4 / jnp.linalg.norm(lin4, axis=1, keepdims=True) * 0.5
    assert out4.shape == (B2, act_dim2)
    assert jnp.allclose(out4, ref4, atol=1e-3, rtol=1e-3), "mismatch (K-tiled)"

    print("KERNEL_OK")
</pallas_src>

<mosaic_0001>
module attributes {stable_mosaic.version = 11 : i64} {
  func.func @kernel(%arg0: i32, %arg1: memref<8x32xf32, #tpu.memory_space<vmem>>, %arg2: memref<32x128xf32, #tpu.memory_space<vmem>>, %arg3: memref<8x128xf32, #tpu.memory_space<vmem>>) attributes {dimension_semantics = [#tpu.dimension_semantics<parallel>], iteration_bounds = array<i64: 1>, scalar_prefetch = 0 : i64, scratch_operands = 0 : i64, tpu.core_type = #tpu.core_type<tc>, window_params = [{transform_indices = @transform_0, window_bounds = array<i64: 8, 32>}, {pipeline_mode = #tpu.pipeline_mode<synchronous>, transform_indices = @transform_1, window_bounds = array<i64: 32, 128>}, {transform_indices = @transform_2, window_bounds = array<i64: 8, 128>}]} {
    %c0 = arith.constant 0 : index
    %c0_0 = arith.constant 0 : index
    %0 = vector.load %arg1[%c0, %c0_0] : memref<8x32xf32, #tpu.memory_space<vmem>>, vector<8x32xf32>
    %c0_1 = arith.constant 0 : index
    %c0_2 = arith.constant 0 : index
    %1 = vector.load %arg2[%c0_1, %c0_2] : memref<32x128xf32, #tpu.memory_space<vmem>>, vector<32x128xf32>
    %cst = arith.constant dense<0.000000e+00> : vector<8x128xf32>
    %2 = tpu.matmul %0, %1, %cst {dimension_numbers = #tpu.dot_dimension_numbers<[1], [0], [0], [1], [0, 0, 1, 1], [], []>} : vector<8x32xf32>, vector<32x128xf32>, vector<8x128xf32> -> vector<8x128xf32>
    %3 = arith.mulf %2, %2 : vector<8x128xf32>
    %cst_3 = arith.constant dense<0.000000e+00> : vector<8xf32>
    %4 = vector.multi_reduction <add>, %3, %cst_3 [1] : vector<8x128xf32> to vector<8xf32>
    %5 = vector.shape_cast %4 : vector<8xf32> to vector<8x1xf32>
    %6 = math.rsqrt %5 : vector<8x1xf32>
    %cst_4 = arith.constant 2.000000e+00 : f32
    %7 = vector.broadcast %cst_4 : f32 to vector<8x1xf32>
    %8 = arith.mulf %6, %7 : vector<8x1xf32>
    %9 = vector.broadcast %8 : vector<8x1xf32> to vector<8x128xf32>
    %10 = arith.mulf %2, %9 : vector<8x128xf32>
    %c0_5 = arith.constant 0 : index
    %c0_6 = arith.constant 0 : index
    %11 = vector.load %arg3[%c0_5, %c0_6] : memref<8x128xf32, #tpu.memory_space<vmem>>, vector<8x128xf32>
    tpu.vector_store %arg3[%c0_5, %c0_6], %10 {strides = array<i32>} : memref<8x128xf32, #tpu.memory_space<vmem>>, vector<8x128xf32>,
    return
  }
  func.func @transform_0(%arg0: i32) -> (i32, i32) {
    %c0_i32 = arith.constant 0 : i32
    %c0_i32_0 = arith.constant 0 : i32
    return %arg0, %c0_i32 : i32, i32
  }
  func.func @transform_1(%arg0: i32) -> (i32, i32) {
    %c0_i32 = arith.constant 0 : i32
    %c0_i32_0 = arith.constant 0 : i32
    %c0_i32_1 = arith.constant 0 : i32
    return %c0_i32, %c0_i32_0 : i32, i32
  }
  func.func @transform_2(%arg0: i32) -> (i32, i32) {
    %c0_i32 = arith.constant 0 : i32
    %c0_i32_0 = arith.constant 0 : i32
    return %arg0, %c0_i32 : i32, i32
  }
}

module attributes {stable_mosaic.version = 11 : i64} {
  func.func @kernel(%arg0: i32, %arg1: memref<8x32xf32, #tpu.memory_space<vmem>>, %arg2: memref<32x128xf32, #tpu.memory_space<vmem>>, %arg3: memref<8x128xf32, #tpu.memory_space<vmem>>) attributes {dimension_semantics = [#tpu.dimension_semantics<parallel>], iteration_bounds = array<i64: 1>, scalar_prefetch = 0 : i64, scratch_operands = 0 : i64, tpu.core_type = #tpu.core_type<tc>, window_params = [{transform_indices = @transform_0, window_bounds = array<i64: 8, 32>}, {pipeline_mode = #tpu.pipeline_mode<synchronous>, transform_indices = @transform_1, window_bounds = array<i64: 32, 128>}, {transform_indices = @transform_2, window_bounds = array<i64: 8, 128>}]} {
    %c0 = arith.constant 0 : index
    %c0_0 = arith.constant 0 : index
    %0 = vector.load %arg1[%c0, %c0_0] : memref<8x32xf32, #tpu.memory_space<vmem>>, vector<8x32xf32>
    %c0_1 = arith.constant 0 : index
    %c0_2 = arith.constant 0 : index
    %1 = vector.load %arg2[%c0_1, %c0_2] : memref<32x128xf32, #tpu.memory_space<vmem>>, vector<32x128xf32>
    %cst = arith.constant dense<0.000000e+00> : vector<8x128xf32>
    %2 = tpu.matmul %0, %1, %cst {dimension_numbers = #tpu.dot_dimension_numbers<[1], [0], [0], [1], [0, 0, 1, 1], [], []>} : vector<8x32xf32>, vector<32x128xf32>, vector<8x128xf32> -> vector<8x128xf32>
    %3 = arith.mulf %2, %2 : vector<8x128xf32>
    %cst_3 = arith.constant dense<0.000000e+00> : vector<8xf32>
    %4 = vector.multi_reduction <add>, %3, %cst_3 [1] : vector<8x128xf32> to vector<8xf32>
    %5 = vector.shape_cast %4 : vector<8xf32> to vector<8x1xf32>
    %6 = math.rsqrt %5 : vector<8x1xf32>
    %cst_4 = arith.constant 2.000000e+00 : f32
    %7 = vector.broadcast %cst_4 : f32 to vector<8x1xf32>
    %8 = arith.mulf %6, %7 : vector<8x1xf32>
    %9 = vector.broadcast %8 : vector<8x1xf32> to vector<8x128xf32>
    %10 = arith.mulf %2, %9 : vector<8x128xf32>
    %c0_5 = arith.constant 0 : index
    %c0_6 = arith.constant 0 : index
    %11 = vector.load %arg3[%c0_5, %c0_6] : memref<8x128xf32, #tpu.memory_space<vmem>>, vector<8x128xf32>
    tpu.vector_store %arg3[%c0_5, %c0_6], %10 {strides = array<i32>} : memref<8x128xf32, #tpu.memory_space<vmem>>, vector<8x128xf32>,
    return
  }
  func.func @transform_0(%arg0: i32) -> (i32, i32) {
    %c0_i32 = arith.constant 0 : i32
    %c0_i32_0 = arith.constant 0 : i32
    return %arg0, %c0_i32 : i32, i32
  }
  func.func @transform_1(%arg0: i32) -> (i32, i32) {
    %c0_i32 = arith.constant 0 : i32
    %c0_i32_0 = arith.constant 0 : i32
    %c0_i32_1 = arith.constant 0 : i32
    return %c0_i32, %c0_i32_0 : i32, i32
  }
  func.func @transform_2(%arg0: i32) -> (i32, i32) {
    %c0_i32 = arith.constant 0 : i32
    %c0_i32_0 = arith.constant 0 : i32
    return %arg0, %c0_i32 : i32, i32
  }
}

</mosaic_0001>

<llo_original>
// kernel: tpu_custom_call.1
$region0: #{tpu_custom_call.1}
  #allocation0 [shape = 'u32[]', space=smem, size = 0x4, offset = 0x4, fixed_abs, tag = 'smem constant byte address 0x4 - core index']
  #allocation1 [shape = 'u32[72,128]{1,0:T(1,128)}', space=vmem, size = 0x9000, scoped, tag = 'internal scratch']
  %s0 = inlined_call_operand.hbm [shape: f32[8,32], index: 0, kind: input, shape index: {}]
  %s1 = inlined_call_operand.hbm [shape: f32[32,128], index: 1, kind: input, shape index: {}]
  %s2 = inlined_call_operand.hbm [shape: f32[8,128], index: 2, kind: output, shape index: {}]
  %s3 = sld [smem:[#allocation0]]
  $region26: #{tpu_custom_call.1} parent=0
    _
  %s5 = ssub.s32 1, %s3
  %s6 = scalar_select 0, %s5, %s3
  $region1: #{tpu_custom_call.1} parent=0
    #allocation2 [shape = 'u8[4096]{0}', space=vmem, size = 0x1000, scoped, tag = 'input window, operand 0, single buffered']
    #allocation3 [shape = 's32[1]{0}', space=sflag, size = 0x4, scoped, tag = 'scoped memory for tpu_custom_call.1']
    #allocation4 [shape = 's32[1]{0}', space=sflag, size = 0x4, scoped, tag = 'scoped memory for tpu_custom_call.1']
    #allocation5 [shape = 'u8[16384]{0}', space=vmem, size = 0x4000, scoped, tag = 'input window, operand 1, single buffered']
    #allocation6 [shape = 's32[1]{0}', space=sflag, size = 0x4, scoped, tag = 'scoped memory for tpu_custom_call.1']
    #allocation7 [shape = 'u8[4096]{0}', space=vmem, size = 0x1000, scoped, tag = 'output window, operand 0, single buffered']
    %7 = vsyncpa [#allocation3], 0
    %8 = vsyncpa [#allocation6], 0
    %9 = vsyncpa [#allocation4], 0
    // Predicated region
    $region2: #{tpu_custom_call.1} parent=1 // pred_check
      _
    $region3: #{tpu_custom_call.1} parent=1 // pred_check_branch
      %11 = sbr.rel (0) target = $region5
    $region4: #{tpu_custom_call.1} parent=1 // pred_region
      %13 = vsyncadd [#allocation3], 0
      %s15 = sshll.u32 %s0, 4
      %s16 = int_to_ptr.hbm [resolvable:$true] %s15
      %s17 = sshll.u32 [#allocation2], 4
      %s18 = int_to_ptr.vmem [resolvable:$true] %s17
      %20 = dma.hbm_to_vmem [thread:$0]  %s16, 128, %s18, [#allocation3]
    $region5: #{tpu_custom_call.1} parent=1 // pred_fallthru
      _
    // Predicated region
    $region6: #{tpu_custom_call.1} parent=1 // pred_check
      _
    $region7: #{tpu_custom_call.1} parent=1 // pred_check_branch
      %22 = sbr.rel (0) target = $region9
    $region8: #{tpu_custom_call.1} parent=1 // pred_region
      %24 = vsyncadd [#allocation6], 0
      %s25 = sshll.u32 %s1, 4
      %s26 = int_to_ptr.hbm [resolvable:$true] %s25
      %s27 = sshll.u32 [#allocation5], 4
      %s28 = int_to_ptr.vmem [resolvable:$true] %s27
      %33 = dma.hbm_to_vmem [thread:$0]  %s26, 512, %s28, [#allocation6], 128, 128, 8
    $region9: #{tpu_custom_call.1} parent=1 // pred_fallthru
      _
    // Predicated region
    $region10: #{tpu_custom_call.1} parent=1 // pred_check
      _
    $region11: #{tpu_custom_call.1} parent=1 // pred_check_branch
      %35 = sbr.rel (0) target = $region13
    $region12: #{tpu_custom_call.1} parent=1 // pred_region
      %37 = dma.done [#allocation3], 128
    $region13: #{tpu_custom_call.1} parent=1 // pred_fallthru
      _
    // Predicated region
    $region14: #{tpu_custom_call.1} parent=1 // pred_check
      _
    $region15: #{tpu_custom_call.1} parent=1 // pred_check_branch
      %39 = sbr.rel (0) target = $region17
    $region16: #{tpu_custom_call.1} parent=1 // pred_region
      %41 = dma.done [#allocation6], 512
    $region17: #{tpu_custom_call.1} parent=1 // pred_fallthru
      _
    %v42 = vld [vmem:[#allocation2] sm:$0xff]
    %v43 = vld [vmem:[#allocation5] sm:$0xff]
    %v44 = vld [vmem:[#allocation5 + $0x8] sm:$0xff]
    %v45 = vld [vmem:[#allocation5 + $0x10] sm:$0xff]
    %v46 = vld [vmem:[#allocation5 + $0x18] sm:$0xff]
    %vm47 = vcmask 261120
    %v49 = vsel %vm47, %v42, 0
    %51 = vmatpush.msra.mxu0 0.0
    %52 = vmatpush.msra.mxu0 0.0
    %53 = vmatpush.msra.mxu0 0.0
    %54 = vmatpush.msra.mxu0 0.0
    %55 = vmatpush.msra.mxu0 0.0
    %56 = vmatpush.msra.mxu0 0.0
    %57 = vmatpush.msra.mxu0 0.0
    %58 = vmatpush.msra.mxu0 0.0
    %59 = vmatpush.msra.mxu0 0.0
    %60 = vmatpush.msra.mxu0 0.0
    %61 = vmatpush.msra.mxu0 0.0
    %62 = vmatpush.msra.mxu0 0.0
    %63 = vmatpush.msra.mxu0 %v46
    %64 = vmatpush.msra.mxu0 %v45
    %65 = vmatpush.msra.mxu0 %v44
    %66 = vmatpush.msra.mxu0 %v43
    %67 = vmatmul.f32.gmra.mxu0 %v49
    %v68 = vpop.f32.mrf.mxu0
    %v69 = vadd.f32 0.0, %v68
    %70 = vdwg.mxu0
    %v71 = vmul.f32 %v69, %v69
    %72 = vadd.xlane.f32.xlu0 %v71
    %v73 = vpop.xlane.xlu0 %72
    %v74 = vrsqrt.pop %v73
    %v75 = vmul.f32 %v74, %v73
    %v76 = vmul.f32 %v75, %v74
    %v77 = vmul.f32 0.5, %v76
    %v78 = vsub.f32 1.5, %v77
    %v79 = vmul.f32 %v74, %v78
    %vm80 = vweird.f32 %v73
    %vm81 = vweird.f32 %v74
    %vm82 = vmor %vm80, %vm81
    %v83 = vsel %vm82, %v74, %v79
    %v84 = vmul.f32 %v83, 2.0
    %v85 = vmul.f32 %v69, %v84
    %86 = vst [vmem:[#allocation7] sm:$0xff] %v85
    // Predicated region
    $region18: #{tpu_custom_call.1} parent=1 // pred_check
      _
    $region19: #{tpu_custom_call.1} parent=1 // pred_check_branch
      %88 = sbr.rel (0) target = $region21
    $region20: #{tpu_custom_call.1} parent=1 // pred_region
      %90 = vsyncadd [#allocation4], 0
      %s92 = sshll.u32 [#allocation7], 4
      %s93 = int_to_ptr.vmem [resolvable:$true] %s92
      %s94 = sshll.u32 %s2, 4
      %s95 = int_to_ptr.hbm [resolvable:$true] %s94
      %97 = dma.vmem_to_hbm [thread:$0]  %s93, 128, %s95, [#allocation4]
    $region21: #{tpu_custom_call.1} parent=1 // pred_fallthru
      _
    // Predicated region
    $region22: #{tpu_custom_call.1} parent=1 // pred_check
      _
    $region23: #{tpu_custom_call.1} parent=1 // pred_check_branch
      %99 = sbr.rel (0) target = $region25
    $region24: #{tpu_custom_call.1} parent=1 // pred_region
      %101 = dma.done [#allocation4], 128
    $region25: #{tpu_custom_call.1} parent=1 // pred_fallthru
      _
    %102 = vsyncpa [#allocation3], 1
    %103 = vsyncpa [#allocation6], 1
    %104 = vsyncpa [#allocation4], 1

// kernel: tpu_custom_call.1
$region0: #{tpu_custom_call.1}
  #allocation0 [shape = 'u32[]', space=smem, size = 0x4, offset = 0x4, fixed_abs, tag = 'smem constant byte address 0x4 - core index']
  #allocation1 [shape = 'u32[72,128]{1,0:T(1,128)}', space=vmem, size = 0x9000, scoped, tag = 'internal scratch']
  %s0 = inlined_call_operand.hbm [shape: f32[8,32], index: 0, kind: input, shape index: {}]
  %s1 = inlined_call_operand.hbm [shape: f32[32,128], index: 1, kind: input, shape index: {}]
  %s2 = inlined_call_operand.hbm [shape: f32[8,128], index: 2, kind: output, shape index: {}]
  %s3 = sld [smem:[#allocation0]]
  $region26: #{tpu_custom_call.1} parent=0
    _
  %s5 = ssub.s32 1, %s3
  %s6 = scalar_select 0, %s5, %s3
  $region1: #{tpu_custom_call.1} parent=0
    #allocation2 [shape = 'u8[4096]{0}', space=vmem, size = 0x1000, scoped, tag = 'input window, operand 0, single buffered']
    #allocation3 [shape = 's32[1]{0}', space=sflag, size = 0x4, scoped, tag = 'scoped memory for tpu_custom_call.1']
    #allocation4 [shape = 's32[1]{0}', space=sflag, size = 0x4, scoped, tag = 'scoped memory for tpu_custom_call.1']
    #allocation5 [shape = 'u8[16384]{0}', space=vmem, size = 0x4000, scoped, tag = 'input window, operand 1, single buffered']
    #allocation6 [shape = 's32[1]{0}', space=sflag, size = 0x4, scoped, tag = 'scoped memory for tpu_custom_call.1']
    #allocation7 [shape = 'u8[4096]{0}', space=vmem, size = 0x1000, scoped, tag = 'output window, operand 0, single buffered']
    %7 = vsyncpa [#allocation3], 0
    %8 = vsyncpa [#allocation6], 0
    %9 = vsyncpa [#allocation4], 0
    // Predicated region
    $region2: #{tpu_custom_call.1} parent=1 // pred_check
      _
    $region3: #{tpu_custom_call.1} parent=1 // pred_check_branch
      %11 = sbr.rel (0) target = $region5
    $region4: #{tpu_custom_call.1} parent=1 // pred_region
      %13 = vsyncadd [#allocation3], 0
      %s15 = sshll.u32 %s0, 4
      %s16 = int_to_ptr.hbm [resolvable:$true] %s15
      %s17 = sshll.u32 [#allocation2], 4
      %s18 = int_to_ptr.vmem [resolvable:$true] %s17
      %20 = dma.hbm_to_vmem [thread:$0]  %s16, 128, %s18, [#allocation3]
    $region5: #{tpu_custom_call.1} parent=1 // pred_fallthru
      _
    // Predicated region
    $region6: #{tpu_custom_call.1} parent=1 // pred_check
      _
    $region7: #{tpu_custom_call.1} parent=1 // pred_check_branch
      %22 = sbr.rel (0) target = $region9
    $region8: #{tpu_custom_call.1} parent=1 // pred_region
      %24 = vsyncadd [#allocation6], 0
      %s25 = sshll.u32 %s1, 4
      %s26 = int_to_ptr.hbm [resolvable:$true] %s25
      %s27 = sshll.u32 [#allocation5], 4
      %s28 = int_to_ptr.vmem [resolvable:$true] %s27
      %33 = dma.hbm_to_vmem [thread:$0]  %s26, 512, %s28, [#allocation6], 128, 128, 8
    $region9: #{tpu_custom_call.1} parent=1 // pred_fallthru
      _
    // Predicated region
    $region10: #{tpu_custom_call.1} parent=1 // pred_check
      _
    $region11: #{tpu_custom_call.1} parent=1 // pred_check_branch
      %35 = sbr.rel (0) target = $region13
    $region12: #{tpu_custom_call.1} parent=1 // pred_region
      %37 = dma.done [#allocation3], 128
    $region13: #{tpu_custom_call.1} parent=1 // pred_fallthru
      _
    // Predicated region
    $region14: #{tpu_custom_call.1} parent=1 // pred_check
      _
    $region15: #{tpu_custom_call.1} parent=1 // pred_check_branch
      %39 = sbr.rel (0) target = $region17
    $region16: #{tpu_custom_call.1} parent=1 // pred_region
      %41 = dma.done [#allocation6], 512
    $region17: #{tpu_custom_call.1} parent=1 // pred_fallthru
      _
    %v42 = vld [vmem:[#allocation2] sm:$0xff]
    %v43 = vld [vmem:[#allocation5] sm:$0xff]
    %v44 = vld [vmem:[#allocation5 + $0x8] sm:$0xff]
    %v45 = vld [vmem:[#allocation5 + $0x10] sm:$0xff]
    %v46 = vld [vmem:[#allocation5 + $0x18] sm:$0xff]
    %vm47 = vcmask 261120
    %v49 = vsel %vm47, %v42, 0
    %51 = vmatpush.msra.mxu0 0.0
    %52 = vmatpush.msra.mxu0 0.0
    %53 = vmatpush.msra.mxu0 0.0
    %54 = vmatpush.msra.mxu0 0.0
    %55 = vmatpush.msra.mxu0 0.0
    %56 = vmatpush.msra.mxu0 0.0
    %57 = vmatpush.msra.mxu0 0.0
    %58 = vmatpush.msra.mxu0 0.0
    %59 = vmatpush.msra.mxu0 0.0
    %60 = vmatpush.msra.mxu0 0.0
    %61 = vmatpush.msra.mxu0 0.0
    %62 = vmatpush.msra.mxu0 0.0
    %63 = vmatpush.msra.mxu0 %v46
    %64 = vmatpush.msra.mxu0 %v45
    %65 = vmatpush.msra.mxu0 %v44
    %66 = vmatpush.msra.mxu0 %v43
    %67 = vmatmul.f32.gmra.mxu0 %v49
    %v68 = vpop.f32.mrf.mxu0
    %v69 = vadd.f32 0.0, %v68
    %70 = vdwg.mxu0
    %v71 = vmul.f32 %v69, %v69
    %72 = vadd.xlane.f32.xlu0 %v71
    %v73 = vpop.xlane.xlu0 %72
    %v74 = vrsqrt.pop %v73
    %v75 = vmul.f32 %v74, %v73
    %v76 = vmul.f32 %v75, %v74
    %v77 = vmul.f32 0.5, %v76
    %v78 = vsub.f32 1.5, %v77
    %v79 = vmul.f32 %v74, %v78
    %vm80 = vweird.f32 %v73
    %vm81 = vweird.f32 %v74
    %vm82 = vmor %vm80, %vm81
    %v83 = vsel %vm82, %v74, %v79
    %v84 = vmul.f32 %v83, 2.0
    %v85 = vmul.f32 %v69, %v84
    %86 = vst [vmem:[#allocation7] sm:$0xff] %v85
    // Predicated region
    $region18: #{tpu_custom_call.1} parent=1 // pred_check
      _
    $region19: #{tpu_custom_call.1} parent=1 // pred_check_branch
      %88 = sbr.rel (0) target = $region21
    $region20: #{tpu_custom_call.1} parent=1 // pred_region
      %90 = vsyncadd [#allocation4], 0
      %s92 = sshll.u32 [#allocation7], 4
      %s93 = int_to_ptr.vmem [resolvable:$true] %s92
      %s94 = sshll.u32 %s2, 4
      %s95 = int_to_ptr.hbm [resolvable:$true] %s94
      %97 = dma.vmem_to_hbm [thread:$0]  %s93, 128, %s95, [#allocation4]
    $region21: #{tpu_custom_call.1} parent=1 // pred_fallthru
      _
    // Predicated region
    $region22: #{tpu_custom_call.1} parent=1 // pred_check
      _
    $region23: #{tpu_custom_call.1} parent=1 // pred_check_branch
      %99 = sbr.rel (0) target = $region25
    $region24: #{tpu_custom_call.1} parent=1 // pred_region
      %101 = dma.done [#allocation4], 128
    $region25: #{tpu_custom_call.1} parent=1 // pred_fallthru
      _
    %102 = vsyncpa [#allocation3], 1
    %103 = vsyncpa [#allocation6], 1
    %104 = vsyncpa [#allocation4], 1

</llo_original>
